<compile_context>
chip_gen: v5e
topology: v5e:2x2
jax: 0.10.0
libtpu: 0.0.40
codegen_flags: <defaults>
</compile_context>

<pallas_src>
import functools
import math

import jax
import jax.numpy as jnp
from jax.experimental import pallas as pl
from jax.experimental.pallas import tpu as pltpu

_LANE = 128


def _cdiv(a, b):
    return -(-a // b)


def _union_metrics_kernel(logits_ref, targets_ref, out_ref,
                          acc_pred, acc_tgt, acc_tp, *,
                          thr_logit, tile_rows, steps, rows_valid):
    """Accumulate per-lane counts of pred==1, tgt==1, pred&tgt over the grid."""
    split = pl.program_id(0)
    step = pl.program_id(1)

    @pl.when(step == 0)
    def _init():
        acc_pred[...] = jnp.zeros_like(acc_pred)
        acc_tgt[...] = jnp.zeros_like(acc_tgt)
        acc_tp[...] = jnp.zeros_like(acc_tp)

    # Logical (unclamped) row offset of this tile in the folded (rows, 128) view.
    row_off = (split * steps + step) * tile_rows

    # Compare in the logits' native dtype (bf16 stays packed on v6e/v7x; Mosaic
    # widens automatically on v5e).  sigmoid is monotonic, so
    #   sigmoid(x) > thr  <=>  x > logit(thr).
    pred = logits_ref[...] > thr_logit                  # bool (tile, 128)
    # Union targets are {0, 1}: no `== 1` compare, just widen in-register.
    tgt_i = targets_ref[...].astype(jnp.int32)          # int32 (tile, 128)

    def _accumulate(pred_b, tgt32):
        acc_pred[...] += jnp.sum(pred_b.astype(jnp.int32), axis=0, keepdims=True)
        acc_tgt[...] += jnp.sum(tgt32, axis=0, keepdims=True)
        acc_tp[...] += jnp.sum(jnp.where(pred_b, tgt32, 0), axis=0, keepdims=True)

    is_full = row_off + tile_rows <= rows_valid

    @pl.when(is_full)
    def _full_tile():                 # common case: no masking work at all
        _accumulate(pred, tgt_i)

    @pl.when(jnp.logical_not(is_full))
    def _ragged_tile():               # last tile / over-provisioned split
        row_ids = jax.lax.broadcasted_iota(jnp.int32, (tile_rows, 1), 0) + row_off
        valid = row_ids < rows_valid
        _accumulate(jnp.logical_and(pred, valid), jnp.where(valid, tgt_i, 0))

    @pl.when(step == pl.num_programs(1) - 1)
    def _finalize():
        out_ref[...] = jnp.concatenate(
            [acc_pred[...], acc_tgt[...], acc_tp[...]], axis=0)[None]


def _default_num_splits():
    # Dual-TensorCore chips (v7x) benefit from sharding the row range across
    # both cores via the leading "parallel" grid axis; single-TC v5e/v6e would
    # only pay extra (masked) grid steps for it.
    try:
        kind = jax.devices()[0].device_kind.lower()
    except Exception:
        return 1
    return 2 if "v7" in kind else 1


def _cmats_from_sums(s_pred, s_tgt, s_tp, n_samples, thr):
    s_pred = s_pred.astype(jnp.float32)
    s_tgt = s_tgt.astype(jnp.float32)
    s_tp = s_tp.astype(jnp.float32)
    # Degenerate thresholds: sigmoid is strictly in (0, 1), so probs > 0 is
    # always True and probs > 1 always False (matches torch for finite logits).
    if thr <= 0.0:
        s_pred = jnp.full_like(s_pred, float(n_samples))
        s_tp = s_tgt
    elif thr >= 1.0:
        s_pred = jnp.zeros_like(s_pred)
        s_tp = jnp.zeros_like(s_tp)
    tp = s_tp
    fp = s_pred - s_tp
    fn = s_tgt - s_tp
    tn = jnp.float32(n_samples) - s_pred - s_tgt + s_tp
    # cmat[c] = [[tn, fp], [fn, tp]]
    return jnp.stack([jnp.stack([tn, fp], axis=-1),
                      jnp.stack([fn, tp], axis=-1)], axis=-2)


def union_metrics_forward(logits, targets, *, num_classes,
                          detection_threshold=0.5, tile_rows=8192,
                          num_splits=None):
    """Per-class binary confusion matrices, shape (num_classes, 2, 2) float32.

    NOTE: assumes targets take values in {0, 1} (union / multilabel binary
    labels), as the original module does; other target values are not
    representable in the 3-sum reduction.
    """
    C = logits.shape[-1]
    assert C == num_classes, "last dim of logits must be num_classes"
    assert targets.shape[-1] == C

    x = jnp.asarray(logits).reshape(-1, C)
    t = jnp.asarray(targets).reshape(-1, C)
    if not jnp.issubdtype(x.dtype, jnp.floating):
        x = x.astype(jnp.float32)
    if t.dtype == jnp.bool_:
        t = t.astype(jnp.int8)            # rare; everything else streams native
    N = x.shape[0]

    thr = float(detection_threshold)
    if 0.0 < thr < 1.0:
        thr_logit = math.log(thr) - math.log1p(-thr)
    else:
        thr_logit = 0.0                    # unused; overridden in _cmats_from_sums

    if num_splits is None:
        num_splits = _default_num_splits()
    num_splits = max(1, int(num_splits))

    if C > _LANE:
        # TODO(synk): num_classes > 128 spans multiple 128-lane groups per
        # sample and is not kernelized; plain-JAX reduction fallback.
        predf = (x > thr_logit).astype(jnp.float32)
        tgtf = t.astype(jnp.float32)
        return _cmats_from_sums(predf.sum(0), tgtf.sum(0),
                                (predf * tgtf).sum(0), N, thr)

    # --- Fold the class axis into the 128 lanes of a vreg row. --------------
    if _LANE % C == 0 and (N * C) % _LANE == 0:
        # Fast path: pure-view reshape, no pad / cast, zero extra HBM traffic.
        c_pad = C
        K = _LANE // C
        x2 = x.reshape(-1, _LANE)
        t2 = t.reshape(-1, _LANE)
    else:
        # Fallback: pad classes to a divisor of 128 and samples to a multiple
        # of K (extra HBM copy; only taken for awkward shapes).
        c_pad = C
        while _LANE % c_pad:
            c_pad += 1                     # terminates: C <= 128 so c_pad <= 128
        K = _LANE // c_pad
        n_rows = _cdiv(N, K)
        pad_val = float(jnp.finfo(x.dtype).min)   # pred = 0 for padded samples
        x2 = jnp.pad(x, ((0, n_rows * K - N), (0, c_pad - C)),
                     constant_values=pad_val).reshape(-1, _LANE)
        t2 = jnp.pad(t, ((0, n_rows * K - N), (0, c_pad - C)),
                     constant_values=0).reshape(-1, _LANE)

    rows = x2.shape[0]

    # --- Tiling: big tiles amortize the ~0.35us per-grid-step overhead. -----
    tile = max(32, (min(int(tile_rows), rows) // 32) * 32)   # mult of 32 (int8 safe)
    if tile > rows:
        tile = rows                        # tiny input: full-extent block is legal
    nblocks = _cdiv(rows, tile)
    steps = _cdiv(nblocks, num_splits)
    last_blk = nblocks - 1

    def in_map(s, i):
        # Clamp so over-provisioned (split, step) pairs re-read an in-bounds
        # block; the kernel masks them out via the logical row offset.
        return (jnp.minimum(s * steps + i, last_blk), 0)

    kernel = functools.partial(_union_metrics_kernel, thr_logit=thr_logit,
                               tile_rows=tile, steps=steps, rows_valid=rows)
    stats = pl.pallas_call(
        kernel,
        out_shape=jax.ShapeDtypeStruct((num_splits, 3, _LANE), jnp.int32),
        grid_spec=pltpu.PrefetchScalarGridSpec(
            num_scalar_prefetch=0,
            grid=(num_splits, steps),
            in_specs=[
                pl.BlockSpec((tile, _LANE), in_map),
                pl.BlockSpec((tile, _LANE), in_map),
            ],
            out_specs=pl.BlockSpec((1, 3, _LANE), lambda s, i: (s, 0, 0)),
            scratch_shapes=[pltpu.VMEM((1, _LANE), jnp.int32),
                            pltpu.VMEM((1, _LANE), jnp.int32),
                            pltpu.VMEM((1, _LANE), jnp.int32)],
        ),
        compiler_params=pltpu.CompilerParams(
            dimension_semantics=("parallel", "arbitrary"),
            vmem_limit_bytes=48 * 1024 * 1024),
    )(x2, t2)

    # Fold: sum splits, then the K lane-replicas per class; drop padded classes.
    stats = stats.sum(axis=0)                                # (3, 128)
    stats = stats.reshape(3, K, c_pad).sum(axis=1)[:, :C]    # (3, C), exact int32
    return _cmats_from_sums(stats[0], stats[1], stats[2], N, thr)


def _reference_cmats(logits, targets, num_classes, thr):
    """Pure-JAX reference of the exact PyTorch semantics."""
    probs = jax.nn.sigmoid(logits.reshape(-1, num_classes).astype(jnp.float32))
    preds = (probs > thr).astype(jnp.int32)
    tg = targets.reshape(-1, num_classes).astype(jnp.int32)
    out = []
    for i in range(num_classes):
        p, g = preds[:, i], tg[:, i]
        out.append(jnp.array(
            [[jnp.sum((g == 0) & (p == 0)), jnp.sum((g == 0) & (p == 1))],
             [jnp.sum((g == 1) & (p == 0)), jnp.sum((g == 1) & (p == 1))]],
            dtype=jnp.float32))
    return jnp.stack(out)


if __name__ == "__main__":
    key = jax.random.PRNGKey(0)
    k1, k2, k3, k4, k5, k6 = jax.random.split(key, 6)

    # 1) Small shapes consistent with the forward: (batch, patches, num_classes).
    #    Fast (zero-copy) path: C=4 divides 128, N*C multiple of 128.
    B, P, C = 2, 64, 4
    logits = jax.random.normal(k1, (B, P, C), dtype=jnp.float32)
    targets = (jax.random.uniform(k2, (B, P, C)) > 0.5).astype(jnp.int32)
    cmats = jax.block_until_ready(
        union_metrics_forward(logits, targets, num_classes=C,
                              detection_threshold=0.5))
    ref = _reference_cmats(logits, targets, C, 0.5)
    assert cmats.shape == (C, 2, 2) and cmats.dtype == jnp.float32
    assert jnp.allclose(cmats, ref), (cmats, ref)

    # 2) Multi-step grid with ragged last tile (exercises the in-kernel mask);
    #    bf16 logits + int8 targets streamed natively.
    B2, P2 = 2, 1040
    logits2 = jax.random.normal(k3, (B2, P2, C), dtype=jnp.bfloat16)
    targets2 = (jax.random.uniform(k4, (B2, P2, C)) > 0.5).astype(jnp.int8)
    cmats2 = jax.block_until_ready(
        union_metrics_forward(logits2, targets2, num_classes=C,
                              detection_threshold=0.5))
    ref2 = _reference_cmats(logits2, targets2, C, 0.5)
    assert jnp.allclose(cmats2, ref2), (cmats2, ref2)

    # 3) Awkward class count (C=3 does not divide 128): fallback pad path.
    C3 = 3
    logits3 = jax.random.normal(k5, (2, 10, C3), dtype=jnp.float32)
    targets3 = (jax.random.uniform(k6, (2, 10, C3)) > 0.5).astype(jnp.int32)
    cmats3 = jax.block_until_ready(
        union_metrics_forward(logits3, targets3, num_classes=C3,
                              detection_threshold=0.3))
    ref3 = _reference_cmats(logits3, targets3, C3, 0.3)
    assert jnp.allclose(cmats3, ref3), (cmats3, ref3)

    # TODO(synk): the incremental/stateful accumulation across multiple
    # forward() calls and the derived metrics (accuracy/recall/F1) are plain
    # host-side math on the returned cmats and are not kernelized.
    print("KERNEL_OK")
</pallas_src>

<mosaic_0001>
module attributes {stable_mosaic.version = 11 : i64} {
  func.func @_union_metrics_kernel(%arg0: i32, %arg1: i32, %arg2: memref<4x128xf32, #tpu.memory_space<vmem>>, %arg3: memref<4x128xi32, #tpu.memory_space<vmem>>, %arg4: memref<1x3x128xi32, #tpu.memory_space<vmem>>, %arg5: memref<1x128xi32, #tpu.memory_space<vmem>>, %arg6: memref<1x128xi32, #tpu.memory_space<vmem>>, %arg7: memref<1x128xi32, #tpu.memory_space<vmem>>) attributes {dimension_semantics = [#tpu.dimension_semantics<parallel>, #tpu.dimension_semantics<arbitrary>], iteration_bounds = array<i64: 1, 1>, scalar_prefetch = 0 : i64, scratch_operands = 3 : i64, tpu.core_type = #tpu.core_type<tc>, window_params = [{transform_indices = @transform_0, window_bounds = array<i64: 4, 128>}, {transform_indices = @transform_1, window_bounds = array<i64: 4, 128>}, {transform_indices = @transform_2, window_bounds = array<i64: 1, 3, 128>}]} {
    %c0_i32 = arith.constant 0 : i32
    %0 = arith.cmpi eq, %arg1, %c0_i32 : i32
    %1 = arith.extui %0 : i1 to i32
    %c0_i32_0 = arith.constant 0 : i32
    %2 = arith.cmpi ne, %1, %c0_i32_0 : i32
    scf.if %2 {
      %c0_i32_10 = arith.constant 0 : i32
      %20 = vector.broadcast %c0_i32_10 : i32 to vector<1x128xi32>
      %c0_11 = arith.constant 0 : index
      %c0_12 = arith.constant 0 : index
      %21 = vector.load %arg5[%c0_11, %c0_12] : memref<1x128xi32, #tpu.memory_space<vmem>>, vector<1x128xi32>
      tpu.vector_store %arg5[%c0_11, %c0_12], %20 {strides = array<i32>} : memref<1x128xi32, #tpu.memory_space<vmem>>, vector<1x128xi32>,
      %c0_i32_13 = arith.constant 0 : i32
      %22 = vector.broadcast %c0_i32_13 : i32 to vector<1x128xi32>
      %c0_14 = arith.constant 0 : index
      %c0_15 = arith.constant 0 : index
      %23 = vector.load %arg6[%c0_14, %c0_15] : memref<1x128xi32, #tpu.memory_space<vmem>>, vector<1x128xi32>
      tpu.vector_store %arg6[%c0_14, %c0_15], %22 {strides = array<i32>} : memref<1x128xi32, #tpu.memory_space<vmem>>, vector<1x128xi32>,
      %c0_i32_16 = arith.constant 0 : i32
      %24 = vector.broadcast %c0_i32_16 : i32 to vector<1x128xi32>
      %c0_17 = arith.constant 0 : index
      %c0_18 = arith.constant 0 : index
      %25 = vector.load %arg7[%c0_17, %c0_18] : memref<1x128xi32, #tpu.memory_space<vmem>>, vector<1x128xi32>
      tpu.vector_store %arg7[%c0_17, %c0_18], %24 {strides = array<i32>} : memref<1x128xi32, #tpu.memory_space<vmem>>, vector<1x128xi32>,
    } else {
    }
    %c1_i32 = arith.constant 1 : i32
    %3 = arith.muli %arg0, %c1_i32 : i32
    %4 = arith.addi %3, %arg1 : i32
    %c4_i32 = arith.constant 4 : i32
    %5 = arith.muli %4, %c4_i32 : i32
    %c0 = arith.constant 0 : index
    %c0_1 = arith.constant 0 : index
    %6 = vector.load %arg2[%c0, %c0_1] : memref<4x128xf32, #tpu.memory_space<vmem>>, vector<4x128xf32>
    %cst = arith.constant 0.000000e+00 : f32
    %7 = vector.broadcast %cst : f32 to vector<4x128xf32>
    %8 = arith.cmpf ogt, %6, %7 : vector<4x128xf32>
    %c0_2 = arith.constant 0 : index
    %c0_3 = arith.constant 0 : index
    %9 = vector.load %arg3[%c0_2, %c0_3] : memref<4x128xi32, #tpu.memory_space<vmem>>, vector<4x128xi32>
    %c4_i32_4 = arith.constant 4 : i32
    %10 = arith.addi %5, %c4_i32_4 : i32
    %c4_i32_5 = arith.constant 4 : i32
    %11 = arith.cmpi sle, %10, %c4_i32_5 : i32
    %12 = arith.extui %11 : i1 to i32
    %c0_i32_6 = arith.constant 0 : i32
    %13 = arith.cmpi ne, %12, %c0_i32_6 : i32
    scf.if %13 {
      %c0_10 = arith.constant 0 : index
      %c0_11 = arith.constant 0 : index
      %20 = vector.load %arg5[%c0_10, %c0_11] : memref<1x128xi32, #tpu.memory_space<vmem>>, vector<1x128xi32>
      %21 = arith.extui %8 : vector<4x128xi1> to vector<4x128xi32>
      %cst_12 = arith.constant dense<0> : vector<128xi32>
      %22 = vector.multi_reduction <add>, %21, %cst_12 [0] : vector<4x128xi32> to vector<128xi32>
      %23 = vector.shape_cast %22 : vector<128xi32> to vector<1x128xi32>
      %24 = arith.addi %20, %23 : vector<1x128xi32>
      %c0_13 = arith.constant 0 : index
      %c0_14 = arith.constant 0 : index
      %25 = vector.load %arg5[%c0_13, %c0_14] : memref<1x128xi32, #tpu.memory_space<vmem>>, vector<1x128xi32>
      tpu.vector_store %arg5[%c0_13, %c0_14], %24 {strides = array<i32>} : memref<1x128xi32, #tpu.memory_space<vmem>>, vector<1x128xi32>,
      %c0_15 = arith.constant 0 : index
      %c0_16 = arith.constant 0 : index
      %26 = vector.load %arg6[%c0_15, %c0_16] : memref<1x128xi32, #tpu.memory_space<vmem>>, vector<1x128xi32>
      %cst_17 = arith.constant dense<0> : vector<128xi32>
      %27 = vector.multi_reduction <add>, %9, %cst_17 [0] : vector<4x128xi32> to vector<128xi32>
      %28 = vector.shape_cast %27 : vector<128xi32> to vector<1x128xi32>
      %29 = arith.addi %26, %28 : vector<1x128xi32>
      %c0_18 = arith.constant 0 : index
      %c0_19 = arith.constant 0 : index
      %30 = vector.load %arg6[%c0_18, %c0_19] : memref<1x128xi32, #tpu.memory_space<vmem>>, vector<1x128xi32>
      tpu.vector_store %arg6[%c0_18, %c0_19], %29 {strides = array<i32>} : memref<1x128xi32, #tpu.memory_space<vmem>>, vector<1x128xi32>,
      %c0_20 = arith.constant 0 : index
      %c0_21 = arith.constant 0 : index
      %31 = vector.load %arg7[%c0_20, %c0_21] : memref<1x128xi32, #tpu.memory_space<vmem>>, vector<1x128xi32>
      %c0_i32_22 = arith.constant 0 : i32
      %32 = vector.broadcast %c0_i32_22 : i32 to vector<4x128xi32>
      %33 = arith.select %8, %9, %32 : vector<4x128xi1>, vector<4x128xi32>
      %cst_23 = arith.constant dense<0> : vector<128xi32>
      %34 = vector.multi_reduction <add>, %33, %cst_23 [0] : vector<4x128xi32> to vector<128xi32>
      %35 = vector.shape_cast %34 : vector<128xi32> to vector<1x128xi32>
      %36 = arith.addi %31, %35 : vector<1x128xi32>
      %c0_24 = arith.constant 0 : index
      %c0_25 = arith.constant 0 : index
      %37 = vector.load %arg7[%c0_24, %c0_25] : memref<1x128xi32, #tpu.memory_space<vmem>>, vector<1x128xi32>
      tpu.vector_store %arg7[%c0_24, %c0_25], %36 {strides = array<i32>} : memref<1x128xi32, #tpu.memory_space<vmem>>, vector<1x128xi32>,
    } else {
    }
    %true = arith.constant true
    %14 = arith.xori %11, %true : i1
    %15 = arith.extui %14 : i1 to i32
    %c0_i32_7 = arith.constant 0 : i32
    %16 = arith.cmpi ne, %15, %c0_i32_7 : i32
    scf.if %16 {
      %20 = tpu.iota {dimensions = array<i32: 0>} : vector<4x1xi32>
      %21 = vector.broadcast %5 : i32 to vector<4x1xi32>
      %22 = arith.addi %20, %21 : vector<4x1xi32>
      %c4_i32_10 = arith.constant 4 : i32
      %23 = vector.broadcast %c4_i32_10 : i32 to vector<4x1xi32>
      %24 = arith.cmpi slt, %22, %23 : vector<4x1xi32>
      %25 = vector.broadcast %24 : vector<4x1xi1> to vector<4x128xi1>
      %26 = arith.andi %8, %25 : vector<4x128xi1>
      %c0_i32_11 = arith.constant 0 : i32
      %27 = vector.shape_cast %24 : vector<4x1xi1> to vector<4x1xi1>
      %28 = vector.broadcast %27 : vector<4x1xi1> to vector<4x128xi1>
      %29 = vector.broadcast %c0_i32_11 : i32 to vector<4x128xi32>
      %30 = arith.select %28, %9, %29 : vector<4x128xi1>, vector<4x128xi32>
      %c0_12 = arith.constant 0 : index
      %c0_13 = arith.constant 0 : index
      %31 = vector.load %arg5[%c0_12, %c0_13] : memref<1x128xi32, #tpu.memory_space<vmem>>, vector<1x128xi32>
      %32 = arith.extui %26 : vector<4x128xi1> to vector<4x128xi32>
      %cst_14 = arith.constant dense<0> : vector<128xi32>
      %33 = vector.multi_reduction <add>, %32, %cst_14 [0] : vector<4x128xi32> to vector<128xi32>
      %34 = vector.shape_cast %33 : vector<128xi32> to vector<1x128xi32>
      %35 = arith.addi %31, %34 : vector<1x128xi32>
      %c0_15 = arith.constant 0 : index
      %c0_16 = arith.constant 0 : index
      %36 = vector.load %arg5[%c0_15, %c0_16] : memref<1x128xi32, #tpu.memory_space<vmem>>, vector<1x128xi32>
      tpu.vector_store %arg5[%c0_15, %c0_16], %35 {strides = array<i32>} : memref<1x128xi32, #tpu.memory_space<vmem>>, vector<1x128xi32>,
      %c0_17 = arith.constant 0 : index
      %c0_18 = arith.constant 0 : index
      %37 = vector.load %arg6[%c0_17, %c0_18] : memref<1x128xi32, #tpu.memory_space<vmem>>, vector<1x128xi32>
      %cst_19 = arith.constant dense<0> : vector<128xi32>
      %38 = vector.multi_reduction <add>, %30, %cst_19 [0] : vector<4x128xi32> to vector<128xi32>
      %39 = vector.shape_cast %38 : vector<128xi32> to vector<1x128xi32>
      %40 = arith.addi %37, %39 : vector<1x128xi32>
      %c0_20 = arith.constant 0 : index
      %c0_21 = arith.constant 0 : index
      %41 = vector.load %arg6[%c0_20, %c0_21] : memref<1x128xi32, #tpu.memory_space<vmem>>, vector<1x128xi32>
      tpu.vector_store %arg6[%c0_20, %c0_21], %40 {strides = array<i32>} : memref<1x128xi32, #tpu.memory_space<vmem>>, vector<1x128xi32>,
      %c0_22 = arith.constant 0 : index
      %c0_23 = arith.constant 0 : index
      %42 = vector.load %arg7[%c0_22, %c0_23] : memref<1x128xi32, #tpu.memory_space<vmem>>, vector<1x128xi32>
      %c0_i32_24 = arith.constant 0 : i32
      %43 = vector.broadcast %c0_i32_24 : i32 to vector<4x128xi32>
      %44 = arith.select %26, %30, %43 : vector<4x128xi1>, vector<4x128xi32>
      %cst_25 = arith.constant dense<0> : vector<128xi32>
      %45 = vector.multi_reduction <add>, %44, %cst_25 [0] : vector<4x128xi32> to vector<128xi32>
      %46 = vector.shape_cast %45 : vector<128xi32> to vector<1x128xi32>
      %47 = arith.addi %42, %46 : vector<1x128xi32>
      %c0_26 = arith.constant 0 : index
      %c0_27 = arith.constant 0 : index
      %48 = vector.load %arg7[%c0_26, %c0_27] : memref<1x128xi32, #tpu.memory_space<vmem>>, vector<1x128xi32>
      tpu.vector_store %arg7[%c0_26, %c0_27], %47 {strides = array<i32>} : memref<1x128xi32, #tpu.memory_space<vmem>>, vector<1x128xi32>,
    } else {
    }
    %c0_i32_8 = arith.constant 0 : i32
    %17 = arith.cmpi eq, %arg1, %c0_i32_8 : i32
    %18 = arith.extui %17 : i1 to i32
    %c0_i32_9 = arith.constant 0 : i32
    %19 = arith.cmpi ne, %18, %c0_i32_9 : i32
    scf.if %19 {
      %c0_10 = arith.constant 0 : index
      %c0_11 = arith.constant 0 : index
      %20 = vector.load %arg5[%c0_10, %c0_11] : memref<1x128xi32, #tpu.memory_space<vmem>>, vector<1x128xi32>
      %c0_12 = arith.constant 0 : index
      %c0_13 = arith.constant 0 : index
      %21 = vector.load %arg6[%c0_12, %c0_13] : memref<1x128xi32, #tpu.memory_space<vmem>>, vector<1x128xi32>
      %c0_14 = arith.constant 0 : index
      %c0_15 = arith.constant 0 : index
      %22 = vector.load %arg7[%c0_14, %c0_15] : memref<1x128xi32, #tpu.memory_space<vmem>>, vector<1x128xi32>
      %23 = tpu.concatenate %20, %21, %22 in 0 : vector<1x128xi32>, vector<1x128xi32>, vector<1x128xi32> -> vector<3x128xi32>
      %24 = vector.shape_cast %23 : vector<3x128xi32> to vector<1x3x128xi32>
      %c0_16 = arith.constant 0 : index
      %c0_17 = arith.constant 0 : index
      %c0_18 = arith.constant 0 : index
      %25 = vector.load %arg4[%c0_16, %c0_17, %c0_18] : memref<1x3x128xi32, #tpu.memory_space<vmem>>, vector<1x3x128xi32>
      tpu.vector_store %arg4[%c0_16, %c0_17, %c0_18], %24 {strides = array<i32>} : memref<1x3x128xi32, #tpu.memory_space<vmem>>, vector<1x3x128xi32>,
    } else {
    }
    return
  }
  func.func @transform_0(%arg0: i32, %arg1: i32) -> (i32, i32) {
    %c1_i32 = arith.constant 1 : i32
    %0 = arith.muli %arg0, %c1_i32 : i32
    %1 = arith.addi %0, %arg1 : i32
    %c0_i32 = arith.constant 0 : i32
    %2 = arith.minsi %1, %c0_i32 : i32
    %c0_i32_0 = arith.constant 0 : i32
    %c0_i32_1 = arith.constant 0 : i32
    return %2, %c0_i32_0 : i32, i32
  }
  func.func @transform_1(%arg0: i32, %arg1: i32) -> (i32, i32) {
    %c1_i32 = arith.constant 1 : i32
    %0 = arith.muli %arg0, %c1_i32 : i32
    %1 = arith.addi %0, %arg1 : i32
    %c0_i32 = arith.constant 0 : i32
    %2 = arith.minsi %1, %c0_i32 : i32
    %c0_i32_0 = arith.constant 0 : i32
    %c0_i32_1 = arith.constant 0 : i32
    return %2, %c0_i32_0 : i32, i32
  }
  func.func @transform_2(%arg0: i32, %arg1: i32) -> (i32, i32, i32) {
    %c0_i32 = arith.constant 0 : i32
    %c0_i32_0 = arith.constant 0 : i32
    %c0_i32_1 = arith.constant 0 : i32
    return %arg0, %c0_i32, %c0_i32_0 : i32, i32, i32
  }
}

</mosaic_0001>

<llo_original>
// kernel: tpu_custom_call.1
$region0: #{tpu_custom_call.1}
  #allocation0 [shape = 'u32[]', space=smem, size = 0x4, offset = 0x4, fixed_abs, tag = 'smem constant byte address 0x4 - core index']
  #allocation1 [shape = 'u32[72,128]{1,0:T(1,128)}', space=vmem, size = 0x9000, scoped, tag = 'internal scratch']
  #allocation2 [shape = 's32[1,128]{1,0:T(1,128)}', space=vmem, size = 0x200, scoped, tag = 'scratch operand']
  #allocation3 [shape = 's32[1,128]{1,0:T(1,128)}', space=vmem, size = 0x200, scoped, tag = 'scratch operand']
  #allocation4 [shape = 's32[1,128]{1,0:T(1,128)}', space=vmem, size = 0x200, scoped, tag = 'scratch operand']
  %s0 = inlined_call_operand.hbm [shape: f32[4,128], index: 0, kind: input, shape index: {}]
  %s1 = inlined_call_operand.hbm [shape: s32[4,128], index: 1, kind: input, shape index: {}]
  %s2 = inlined_call_operand.vmem [shape: s32[1,3,128], index: 2, kind: output, shape index: {}]
  %s3 = sld [smem:[#allocation0]]
  $region42: #{tpu_custom_call.1} parent=0
    _
  %s5 = ssub.s32 1, %s3
  %s6 = scalar_select 0, %s5, %s3
  $region1: #{tpu_custom_call.1} parent=0
    #allocation5 [shape = 'u8[2048]{0}', space=vmem, size = 0x800, scoped, tag = 'input window, operand 0, single buffered']
    #allocation6 [shape = 's32[1]{0}', space=sflag, size = 0x4, scoped, tag = 'scoped memory for tpu_custom_call.1']
    #allocation7 [shape = 'u8[2048]{0}', space=vmem, size = 0x800, scoped, tag = 'input window, operand 1, single buffered']
    #allocation8 [shape = 's32[1]{0}', space=sflag, size = 0x4, scoped, tag = 'scoped memory for tpu_custom_call.1']
    %7 = vsyncpa [#allocation6], 0
    %8 = vsyncpa [#allocation8], 0
    // Predicated region
    $region2: #{tpu_custom_call.1} parent=1 // pred_check
      _
    $region3: #{tpu_custom_call.1} parent=1 // pred_check_branch
      %10 = sbr.rel (0) target = $region5
    $region4: #{tpu_custom_call.1} parent=1 // pred_region
      %s11 = sadd.s32 0, 0
      %p12 = scmp.lt.s32.totalorder %s11, 0
      %s13 = scalar_select %p12, %s11, 0
      %15 = vsyncadd [#allocation6], 0
      %s16 = smul.addr %s13, 4
      %s17 = scalar_lea.hbm %s0, %s16
      %s19 = sshll.u32 %s17, 4
      %s20 = int_to_ptr.hbm [resolvable:$true] %s19
      %s21 = sshll.u32 [#allocation5], 4
      %s22 = int_to_ptr.vmem [resolvable:$true] %s21
      %24 = dma.hbm_to_vmem [thread:$0]  %s20, 64, %s22, [#allocation6]
    $region5: #{tpu_custom_call.1} parent=1 // pred_fallthru
      _
    // Predicated region
    $region6: #{tpu_custom_call.1} parent=1 // pred_check
      _
    $region7: #{tpu_custom_call.1} parent=1 // pred_check_branch
      %26 = sbr.rel (0) target = $region9
    $region8: #{tpu_custom_call.1} parent=1 // pred_region
      %s27 = sadd.s32 0, 0
      %p28 = scmp.lt.s32.totalorder %s27, 0
      %s29 = scalar_select %p28, %s27, 0
      %31 = vsyncadd [#allocation8], 0
      %s32 = smul.addr %s29, 4
      %s33 = scalar_lea.hbm %s1, %s32
      %s35 = sshll.u32 %s33, 4
      %s36 = int_to_ptr.hbm [resolvable:$true] %s35
      %s37 = sshll.u32 [#allocation7], 4
      %s38 = int_to_ptr.vmem [resolvable:$true] %s37
      %40 = dma.hbm_to_vmem [thread:$0]  %s36, 64, %s38, [#allocation8]
    $region9: #{tpu_custom_call.1} parent=1 // pred_fallthru
      _
    // Predicated region
    $region10: #{tpu_custom_call.1} parent=1 // pred_check
      _
    $region11: #{tpu_custom_call.1} parent=1 // pred_check_branch
      %42 = sbr.rel (0) target = $region13
    $region12: #{tpu_custom_call.1} parent=1 // pred_region
      %44 = dma.done [#allocation6], 64
    $region13: #{tpu_custom_call.1} parent=1 // pred_fallthru
      _
    // Predicated region
    $region14: #{tpu_custom_call.1} parent=1 // pred_check
      _
    $region15: #{tpu_custom_call.1} parent=1 // pred_check_branch
      %46 = sbr.rel (0) target = $region17
    $region16: #{tpu_custom_call.1} parent=1 // pred_region
      %48 = dma.done [#allocation8], 64
    $region17: #{tpu_custom_call.1} parent=1 // pred_fallthru
      _
    %s49 = sadd.s32 0, 0
    %p50 = scmp.lt.s32.totalorder %s49, 0
    %s51 = scalar_select %p50, %s49, 0
    %s52 = sadd.s32 0, 0
    %p53 = scmp.lt.s32.totalorder %s52, 0
    %s54 = scalar_select %p53, %s52, 0
    %p55 = scmp.eq.s32.totalorder 0, 0
    // Predicated region
    $region18: #{tpu_custom_call.1} parent=1 // pred_check
      %p56 = pneg %p55
    $region19: #{tpu_custom_call.1} parent=1 // pred_check_branch
      %58 = sbr.rel (%p56) target = $region21
    $region20: #{tpu_custom_call.1} parent=1 // pred_region
      %59 = vst [vmem:[#allocation2] sm:$0x1] 0
      %60 = vst [vmem:[#allocation3] sm:$0x1] 0
      %61 = vst [vmem:[#allocation4] sm:$0x1] 0
    $region21: #{tpu_custom_call.1} parent=1 // pred_fallthru
      _
    %s62 = sadd.s32 0, 0
    %s63 = smul.u32 %s62, 4
    %v64 = vld [vmem:[#allocation5] sm:$0xf]
    %vm65 = vcmp.gt.f32.partialorder %v64, 0.0
    %v66 = vld [vmem:[#allocation7] sm:$0xf]
    %s67 = sadd.s32 %s63, 4
    %p68 = scmp.le.s32.totalorder %s67, 4
    // Predicated region
    $region22: #{tpu_custom_call.1} parent=1 // pred_check
      %p69 = pneg %p68
    $region23: #{tpu_custom_call.1} parent=1 // pred_check_branch
      %71 = sbr.rel (%p69) target = $region25
    $region24: #{tpu_custom_call.1} parent=1 // pred_region
      %v72 = vld [vmem:[#allocation2] sm:$0x1]
      %v73 = vsel %vm65, 1, 0
      %vm74 = vcmask 1043456
      %v75 = vsel %vm74, %v73, 0
      %v76 = vrot.slane %v75, 4
      %v77 = vadd.s32 %v75, %v76
      %v78 = vrot.slane %v77, 2
      %v79 = vadd.s32 %v77, %v78
      %v80 = vrot.slane %v79, 1
      %v81 = vadd.s32 %v79, %v80
      %v82 = vadd.s32 %v72, %v81
      %83 = vst [vmem:[#allocation2] sm:$0x1] %v82
      %v84 = vld [vmem:[#allocation3] sm:$0x1]
      %v85 = vsel %vm74, %v66, 0
      %v86 = vrot.slane %v85, 4
      %v87 = vadd.s32 %v85, %v86
      %v88 = vrot.slane %v87, 2
      %v89 = vadd.s32 %v87, %v88
      %v90 = vrot.slane %v89, 1
      %v91 = vadd.s32 %v89, %v90
      %v92 = vadd.s32 %v84, %v91
      %93 = vst [vmem:[#allocation3] sm:$0x1] %v92
      %v94 = vld [vmem:[#allocation4] sm:$0x1]
      %v95 = vsel %vm65, %v66, 0
      %v96 = vsel %vm74, %v95, 0
      %v97 = vrot.slane %v96, 4
      %v98 = vadd.s32 %v96, %v97
      %v99 = vrot.slane %v98, 2
      %v100 = vadd.s32 %v98, %v99
      %v101 = vrot.slane %v100, 1
      %v102 = vadd.s32 %v100, %v101
      %v103 = vadd.s32 %v94, %v102
      %104 = vst [vmem:[#allocation4] sm:$0x1] %v103
    $region25: #{tpu_custom_call.1} parent=1 // pred_fallthru
      _
    %p105 = scmp.gt.s32.totalorder %s67, 4
    // Predicated region
    $region26: #{tpu_custom_call.1} parent=1 // pred_check
      %p106 = pneg %p105
    $region27: #{tpu_custom_call.1} parent=1 // pred_check_branch
      %108 = sbr.rel (%p106) target = $region29
    $region28: #{tpu_custom_call.1} parent=1 // pred_region
      %v109 = vlaneseq
      %v110 = vshrl.u32 %v109, 7
      %v111 = vstv %s63
      %v112 = vadd.s32 %v110, %v111
      %vm113 = vcmp.lt.s32.totalorder %v112, 4
      %v114 = vsel %vm113, 1, 0
      %vm115 = vcmp.eq.s32.totalorder %v114, 1
      %vm116 = vmand %vm65, %vm115
      %v117 = vsel %vm115, %v66, 0
      %v118 = vld [vmem:[#allocation2] sm:$0x1]
      %v119 = vsel %vm116, 1, 0
      %vm120 = vcmask 1043456
      %v121 = vsel %vm120, %v119, 0
      %v122 = vrot.slane %v121, 4
      %v123 = vadd.s32 %v121, %v122
      %v124 = vrot.slane %v123, 2
      %v125 = vadd.s32 %v123, %v124
      %v126 = vrot.slane %v125, 1
      %v127 = vadd.s32 %v125, %v126
      %v128 = vadd.s32 %v118, %v127
      %129 = vst [vmem:[#allocation2] sm:$0x1] %v128
      %v130 = vld [vmem:[#allocation3] sm:$0x1]
      %v131 = vsel %vm120, %v117, 0
      %v132 = vrot.slane %v131, 4
      %v133 = vadd.s32 %v131, %v132
      %v134 = vrot.slane %v133, 2
      %v135 = vadd.s32 %v133, %v134
      %v136 = vrot.slane %v135, 1
      %v137 = vadd.s32 %v135, %v136
      %v138 = vadd.s32 %v130, %v137
      %139 = vst [vmem:[#allocation3] sm:$0x1] %v138
      %v140 = vld [vmem:[#allocation4] sm:$0x1]
      %v141 = vsel %vm116, %v117, 0
      %v142 = vsel %vm120, %v141, 0
      %v143 = vrot.slane %v142, 4
      %v144 = vadd.s32 %v142, %v143
      %v145 = vrot.slane %v144, 2
      %v146 = vadd.s32 %v144, %v145
      %v147 = vrot.slane %v146, 1
      %v148 = vadd.s32 %v146, %v147
      %v149 = vadd.s32 %v140, %v148
      %150 = vst [vmem:[#allocation4] sm:$0x1] %v149
    $region29: #{tpu_custom_call.1} parent=1 // pred_fallthru
      _
    // Predicated region
    $region30: #{tpu_custom_call.1} parent=1 // pred_check
      %p151 = pneg %p55
    $region31: #{tpu_custom_call.1} parent=1 // pred_check_branch
      %153 = sbr.rel (%p151) target = $region33
    $region32: #{tpu_custom_call.1} parent=1 // pred_region
      %v154 = vld [vmem:[#allocation2] sm:$0x1]
      %v155 = vld [vmem:[#allocation3] sm:$0x1]
      %v156 = vld [vmem:[#allocation4] sm:$0x1]
      %v157 = vperm.slane %v155, 0
      %v158 = vperm.slane %v156, 0
      %vm159 = vcmask 1040384
      %v160 = vsel %vm159, %v154, %v157
      %vm161 = vcmask 1041408
      %v162 = vsel %vm161, %v160, %v158
      %163 = vst [vmem:[%s2] sm:$0x7] %v162
    $region33: #{tpu_custom_call.1} parent=1 // pred_fallthru
      _
    // Predicated region
    $region34: #{tpu_custom_call.1} parent=1 // pred_check
      _
    $region35: #{tpu_custom_call.1} parent=1 // pred_check_branch
      %165 = sbr.rel (0) target = $region37
    $region36: #{tpu_custom_call.1} parent=1 // pred_region
      _
    $region37: #{tpu_custom_call.1} parent=1 // pred_fallthru
      _
    // Predicated region
    $region38: #{tpu_custom_call.1} parent=1 // pred_check
      _
    $region39: #{tpu_custom_call.1} parent=1 // pred_check_branch
      %167 = sbr.rel (0) target = $region41
    $region40: #{tpu_custom_call.1} parent=1 // pred_region
      _
    $region41: #{tpu_custom_call.1} parent=1 // pred_fallthru
      _
    %168 = vsyncpa [#allocation6], 1
    %169 = vsyncpa [#allocation8], 1

</llo_original>
